<compile_context>
chip_gen: v6e
topology: v6e:2x2x1
jax: 0.10.0
libtpu: 0.0.40
codegen_flags: <defaults>
</compile_context>

<pallas_src>
import jax
import jax.numpy as jnp
from jax import lax
from jax.experimental import pallas as pl
from jax.experimental.pallas import tpu as pltpu

_LANE = 128
_SUBLANE = 8
_T_CAP = 2048          # max output-pixel tile (lanes)
_CHUNK_ROW_CAP = 32    # max reduce-axis rows folded per MXU pass


def _round_up(x, m):
    return ((x + m - 1) // m) * m


def _largest_divisor_le(n, cap):
    cap = max(1, min(n, cap))
    for d in range(cap, 0, -1):
        if n % d == 0:
            return d
    return 1


def _vmem_budget_bytes():
    # Per-core VMEM differs per generation (v5e/v6e: 128 MiB, v7x: 64 MiB).
    # Leave ~25% headroom for compiler-internal scratch.
    try:
        cap = int(pltpu.get_tpu_info().vmem_capacity_bytes)
    except Exception:
        cap = 64 * 1024 * 1024   # conservative (v7x) fallback
    return max(16 * 1024 * 1024, (cap * 3) // 4)


def _build_kernel(N, C_pad, Hr, Wm, HW_pad, T, Hc, mm_dtype,
                  src_dtype, coord_dtype, out_dtype, vmem_limit):
    n_tiles = HW_pad // T
    n_chunks = Hr // Hc
    rows_per_chunk = Hc * C_pad

    def kernel(coord_ref, src_ref, out_ref, *scratch):
        # coord_ref: (2, T)  pre-scaled sampling coords (matmul-axis, reduce-axis)
        # src_ref:   (Hr*C_pad, Wm)  layout: (reduce-pos, channel) x matmul-axis
        # out_ref:   (C_pad, T)
        cm = jnp.clip(coord_ref[0:1, :].astype(jnp.float32), 0.0, float(Wm - 1))
        cr = jnp.clip(coord_ref[1:2, :].astype(jnp.float32), 0.0, float(Hr - 1))

        m0f = jnp.floor(cm)
        r0f = jnp.floor(cr)
        wm1 = cm - m0f
        wm0 = 1.0 - wm1
        wr1 = cr - r0f
        wr0 = 1.0 - wr1
        m0 = m0f.astype(jnp.int32)
        m1 = jnp.minimum(m0 + 1, Wm - 1)
        r0 = r0f.astype(jnp.int32)
        r1 = jnp.minimum(r0 + 1, Hr - 1)

        # Two-tap one-hot weights for the MXU-contracted axis.  When a tap is
        # clamped at the border (m1 == m0) the where-terms sum the weights,
        # matching grid_sample's 'border' semantics exactly.
        mq = lax.broadcasted_iota(jnp.int32, (Wm, T), 0)
        Am = (jnp.where(mq == m0, wm0, 0.0)
              + jnp.where(mq == m1, wm1, 0.0)).astype(mm_dtype)

        def chunk(c, row0):
            # Interpolate along the matmul axis for one chunk of reduce rows.
            rows = src_ref[pl.ds(row0, rows_per_chunk), :].astype(mm_dtype)
            part = jnp.dot(rows, Am, preferred_element_type=jnp.float32)
            part = part.reshape(Hc, C_pad, T)
            # Two-tap weighted reduce along the (small) reduce axis, f32 VPU.
            hq = lax.broadcasted_iota(jnp.int32, (Hc, T), 0) + c * Hc
            Ar = jnp.where(hq == r0, wr0, 0.0) + jnp.where(hq == r1, wr1, 0.0)
            return jnp.sum(part * Ar[:, None, :], axis=0)       # (C_pad, T) f32

        if n_chunks == 1:
            out_ref[...] = chunk(0, 0).astype(out_ref.dtype)
        else:
            acc_ref = scratch[0]
            acc_ref[...] = jnp.zeros_like(acc_ref)

            def body(c, carry):
                row0 = pl.multiple_of(c * rows_per_chunk, rows_per_chunk)
                acc_ref[...] += chunk(c, row0)
                return carry

            lax.fori_loop(0, n_chunks, body, 0, unroll=(n_chunks <= 8))
            out_ref[...] = acc_ref[...].astype(out_ref.dtype)

    scratch_shapes = []
    if n_chunks > 1:
        scratch_shapes.append(pltpu.VMEM((C_pad, T), jnp.float32))

    grid_spec = pltpu.PrefetchScalarGridSpec(
        num_scalar_prefetch=0,
        grid=(N, n_tiles),
        in_specs=[
            pl.BlockSpec((None, 2, T), lambda n, t: (n, 0, t)),            # coords
            pl.BlockSpec((None, Hr * C_pad, Wm), lambda n, t: (n, 0, 0)),  # src (resident over t)
        ],
        out_specs=pl.BlockSpec((None, C_pad, T), lambda n, t: (n, 0, t)),
        scratch_shapes=scratch_shapes,
    )

    steps = N * n_tiles
    src_it = jnp.dtype(src_dtype).itemsize
    out_it = jnp.dtype(out_dtype).itemsize
    coord_it = jnp.dtype(coord_dtype).itemsize
    cost = pl.CostEstimate(
        flops=steps * (2 * Hr * C_pad * Wm * T + 3 * Hr * C_pad * T),
        transcendentals=0,
        bytes_accessed=(N * Hr * C_pad * Wm * src_it
                        + N * 2 * HW_pad * coord_it
                        + N * C_pad * HW_pad * out_it),
    )

    return pl.pallas_call(
        kernel,
        out_shape=jax.ShapeDtypeStruct((N, C_pad, HW_pad), out_dtype),
        grid_spec=grid_spec,
        compiler_params=pltpu.CompilerParams(
            # Megacore split on the batch axis: each core keeps its own src
            # block resident instead of both cores re-DMAing it for t tiles.
            dimension_semantics=("parallel", "arbitrary"),
            vmem_limit_bytes=int(vmem_limit)),
        cost_estimate=cost,
    )


def spatial_transformer(src, flow, *, max_chunk_rows=None):
    """SpatialTransformer forward: src (N,C,H,W), flow (N,2,H,W) -> (N,C,H,W).

    bilinear, padding_mode='border', align_corners=False (matches the module).
    """
    N, C, H, W = src.shape
    assert flow.shape == (N, 2, H, W)
    # TODO(synk): degenerate H==1 or W==1 (division by size-1==0 in the module) unsupported.
    assert H > 1 and W > 1
    HW = H * W

    C_pad = _round_up(C, _SUBLANE)
    hw_lane = _round_up(HW, _LANE)

    # Larger spatial axis -> MXU contraction (K); smaller -> VPU two-tap reduce.
    mxu_on_h = H > W
    Wm, Hr = (H, W) if mxu_on_h else (W, H)

    src_dtype = src.dtype
    out_dtype = src.dtype
    mm_dtype = jnp.bfloat16 if src_dtype == jnp.bfloat16 else jnp.float32
    src_it = jnp.dtype(src_dtype).itemsize
    out_it = jnp.dtype(out_dtype).itemsize
    mm_it = jnp.dtype(mm_dtype).itemsize

    # ---- VMEM budgeting: size T (pixel tile) and the reduce-axis chunk Hc. ----
    budget = _vmem_budget_bytes()
    src_bytes = Hr * C_pad * Wm * src_it                       # resident src block
    chunk_budget = min(4 << 20, max(256 << 10, budget // 8))   # per-pass MXU partial
    fixed = 2 * src_bytes + chunk_budget + (1 << 20)           # 2x double-buffered src + slack
    avail = budget - fixed
    # per-output-lane VMEM: out (x2 buffers) + accumulator + Am/iota/where temps + coords
    per_lane = C_pad * (2 * out_it + 4) + Wm * (mm_it + 12) + 64
    t_budget = max(_LANE, avail // per_lane) if avail > 0 else _LANE
    t_cap = max(_LANE, min(_T_CAP, int(t_budget), hw_lane))
    t_cap = (t_cap // _LANE) * _LANE
    T = _LANE
    for cand in range(t_cap, _LANE - 1, -_LANE):   # largest lane-multiple dividing hw_lane
        if hw_lane % cand == 0:
            T = cand
            break
    HW_pad = hw_lane

    cap_rows = _CHUNK_ROW_CAP if max_chunk_rows is None else int(max_chunk_rows)
    hc_cap = max(1, min(cap_rows, chunk_budget // (C_pad * T * 4 * 2)))
    Hc = _largest_divisor_le(Hr, hc_cap)
    # TODO(synk): for very large H*W the dense two-tap formulation (O(C*HW*max(H,W))
    # MACs) should be replaced by a gather-style kernel with scalar-prefetched rows.

    # ---- src layout: (N, reduce_axis, C_pad, matmul_axis) -> (N, Hr*C_pad, Wm) ----
    src_p = src
    if C_pad != C:
        src_p = jnp.pad(src_p, ((0, 0), (0, C_pad - C), (0, 0), (0, 0)))
    if mxu_on_h:
        src_p = jnp.transpose(src_p, (0, 3, 1, 2))   # (N, W, C_pad, H)
    else:
        src_p = jnp.transpose(src_p, (0, 2, 1, 3))   # (N, H, C_pad, W)
    src_p = src_p.reshape(N, Hr * C_pad, Wm)

    # ---- pre-folded sampling coordinates: ix = (x + flow_x)*W/(W-1) - 0.5 (same for y).
    #      Single FMA, removes the in-kernel divide and the base-coord DMA stream. ----
    yy, xx = jnp.meshgrid(jnp.arange(H, dtype=jnp.float32),
                          jnp.arange(W, dtype=jnp.float32), indexing="ij")
    ix = (xx[None] + flow[:, 0].astype(jnp.float32)) * (W / (W - 1.0)) - 0.5
    iy = (yy[None] + flow[:, 1].astype(jnp.float32)) * (H / (H - 1.0)) - 0.5
    coords = jnp.stack([iy, ix] if mxu_on_h else [ix, iy], axis=1)   # (N, 2, H, W)
    coords = coords.reshape(N, 2, HW)
    if HW_pad != HW:
        coords = jnp.pad(coords, ((0, 0), (0, 0), (0, HW_pad - HW)))

    fn = _build_kernel(N, C_pad, Hr, Wm, HW_pad, T, Hc, mm_dtype,
                       src_dtype, coords.dtype, out_dtype, budget)
    out = fn(coords, src_p)                                    # (N, C_pad, HW_pad)
    return out[:, :C, :HW].reshape(N, C, H, W)


def _reference(src, flow):
    """Pure-JAX reference of the exact PyTorch forward semantics."""
    N, C, H, W = src.shape
    yy, xx = jnp.meshgrid(jnp.arange(H), jnp.arange(W), indexing="ij")
    x = xx.astype(jnp.float32)[None] + flow[:, 0]
    y = yy.astype(jnp.float32)[None] + flow[:, 1]
    xn = 2.0 * (x / (W - 1) - 0.5)
    yn = 2.0 * (y / (H - 1) - 0.5)
    ix = ((xn + 1.0) * W - 1.0) * 0.5
    iy = ((yn + 1.0) * H - 1.0) * 0.5
    ix = jnp.clip(ix, 0.0, W - 1)
    iy = jnp.clip(iy, 0.0, H - 1)
    x0 = jnp.floor(ix)
    y0 = jnp.floor(iy)
    wx1 = ix - x0
    wx0 = 1.0 - wx1
    wy1 = iy - y0
    wy0 = 1.0 - wy1
    x0i = jnp.clip(x0.astype(jnp.int32), 0, W - 1)
    x1i = jnp.clip(x0.astype(jnp.int32) + 1, 0, W - 1)
    y0i = jnp.clip(y0.astype(jnp.int32), 0, H - 1)
    y1i = jnp.clip(y0.astype(jnp.int32) + 1, 0, H - 1)
    src_flat = src.reshape(N, C, H * W)

    def gather(yi, xi):
        idx = (yi * W + xi).reshape(N, 1, H * W)
        idx = jnp.broadcast_to(idx, (N, C, H * W))
        return jnp.take_along_axis(src_flat, idx, axis=2).reshape(N, C, H, W)

    out = (gather(y0i, x0i) * (wy0 * wx0)[:, None]
           + gather(y0i, x1i) * (wy0 * wx1)[:, None]
           + gather(y1i, x0i) * (wy1 * wx0)[:, None]
           + gather(y1i, x1i) * (wy1 * wx1)[:, None])
    return out


if __name__ == "__main__":
    key = jax.random.PRNGKey(0)
    k1, k2, k3, k4 = jax.random.split(key, 4)

    # Case 1: square image -> single-chunk fast path, matmul on W.
    N, C, H, W = 2, 4, 16, 16
    src = jax.random.normal(k1, (N, C, H, W), dtype=jnp.float32)
    flow = 2.0 * jax.random.normal(k2, (N, 2, H, W), dtype=jnp.float32)
    out = jax.block_until_ready(spatial_transformer(src, flow))
    ref = jax.block_until_ready(_reference(src, flow))
    assert out.shape == (N, C, H, W)
    assert jnp.allclose(out, ref, atol=1e-4, rtol=1e-4), "case 1 mismatch"

    # Case 2: H > W (axis-role swap: matmul on H) + forced multi-chunk reduce loop.
    N2, C2, H2, W2 = 2, 3, 24, 12
    src2 = jax.random.normal(k3, (N2, C2, H2, W2), dtype=jnp.float32)
    flow2 = 3.0 * jax.random.normal(k4, (N2, 2, H2, W2), dtype=jnp.float32)
    out2 = jax.block_until_ready(spatial_transformer(src2, flow2, max_chunk_rows=4))
    ref2 = jax.block_until_ready(_reference(src2, flow2))
    assert out2.shape == (N2, C2, H2, W2)
    assert jnp.allclose(out2, ref2, atol=1e-4, rtol=1e-4), "case 2 mismatch"

    print("KERNEL_OK")
</pallas_src>

<mosaic_0001>
module attributes {stable_mosaic.version = 11 : i64} {
  func.func @kernel(%arg0: i32, %arg1: i32, %arg2: memref<1x2x256xf32, #tpu.memory_space<vmem>>, %arg3: memref<1x128x16xf32, #tpu.memory_space<vmem>>, %arg4: memref<1x8x256xf32, #tpu.memory_space<vmem>>) attributes {dimension_semantics = [#tpu.dimension_semantics<parallel>, #tpu.dimension_semantics<arbitrary>], iteration_bounds = array<i64: 2, 1>, scalar_prefetch = 0 : i64, scratch_operands = 0 : i64, tpu.core_type = #tpu.core_type<tc>, window_params = [{transform_indices = @transform_0, window_bounds = array<i64: 1, 2, 256>}, {transform_indices = @transform_1, window_bounds = array<i64: 1, 128, 16>}, {transform_indices = @transform_2, window_bounds = array<i64: 1, 8, 256>}]} {
    %c0 = arith.constant 0 : index
    %c0_0 = arith.constant 0 : index
    %c0_1 = arith.constant 0 : index
    %0 = vector.load %arg2[%c0, %c0_0, %c0_1] : memref<1x2x256xf32, #tpu.memory_space<vmem>>, vector<1x1x256xf32>
    %1 = vector.shape_cast %0 : vector<1x1x256xf32> to vector<1x256xf32>
    %cst = arith.constant 0.000000e+00 : f32
    %cst_2 = arith.constant 1.500000e+01 : f32
    %2 = vector.broadcast %cst : f32 to vector<1x256xf32>
    %3 = arith.maximumf %2, %1 : vector<1x256xf32>
    %4 = vector.broadcast %cst_2 : f32 to vector<1x256xf32>
    %5 = arith.minimumf %4, %3 : vector<1x256xf32>
    %c0_3 = arith.constant 0 : index
    %c1 = arith.constant 1 : index
    %c0_4 = arith.constant 0 : index
    %6 = vector.load %arg2[%c0_3, %c1, %c0_4] : memref<1x2x256xf32, #tpu.memory_space<vmem>>, vector<1x1x256xf32>
    %7 = vector.shape_cast %6 : vector<1x1x256xf32> to vector<1x256xf32>
    %cst_5 = arith.constant 0.000000e+00 : f32
    %cst_6 = arith.constant 1.500000e+01 : f32
    %8 = vector.broadcast %cst_5 : f32 to vector<1x256xf32>
    %9 = arith.maximumf %8, %7 : vector<1x256xf32>
    %10 = vector.broadcast %cst_6 : f32 to vector<1x256xf32>
    %11 = arith.minimumf %10, %9 : vector<1x256xf32>
    %12 = math.floor %5 : vector<1x256xf32>
    %13 = math.floor %11 : vector<1x256xf32>
    %14 = arith.subf %5, %12 : vector<1x256xf32>
    %cst_7 = arith.constant 1.000000e+00 : f32
    %15 = vector.broadcast %cst_7 : f32 to vector<1x256xf32>
    %16 = arith.subf %15, %14 : vector<1x256xf32>
    %17 = arith.subf %11, %13 : vector<1x256xf32>
    %cst_8 = arith.constant 1.000000e+00 : f32
    %18 = vector.broadcast %cst_8 : f32 to vector<1x256xf32>
    %19 = arith.subf %18, %17 : vector<1x256xf32>
    %20 = arith.fptosi %12 : vector<1x256xf32> to vector<1x256xi32>
    %c1_i32 = arith.constant 1 : i32
    %21 = vector.broadcast %c1_i32 : i32 to vector<1x256xi32>
    %22 = arith.addi %20, %21 : vector<1x256xi32>
    %c15_i32 = arith.constant 15 : i32
    %23 = vector.broadcast %c15_i32 : i32 to vector<1x256xi32>
    %24 = arith.minsi %22, %23 : vector<1x256xi32>
    %25 = arith.fptosi %13 : vector<1x256xf32> to vector<1x256xi32>
    %c1_i32_9 = arith.constant 1 : i32
    %26 = vector.broadcast %c1_i32_9 : i32 to vector<1x256xi32>
    %27 = arith.addi %25, %26 : vector<1x256xi32>
    %c15_i32_10 = arith.constant 15 : i32
    %28 = vector.broadcast %c15_i32_10 : i32 to vector<1x256xi32>
    %29 = arith.minsi %27, %28 : vector<1x256xi32>
    %30 = tpu.iota {dimensions = array<i32: 0>} : vector<16x256xi32>
    %31 = vector.broadcast %20 : vector<1x256xi32> to vector<16x256xi32>
    %32 = arith.cmpi eq, %30, %31 : vector<16x256xi32>
    %cst_11 = arith.constant 0.000000e+00 : f32
    %33 = vector.shape_cast %16 : vector<1x256xf32> to vector<1x256xf32>
    %34 = vector.broadcast %33 : vector<1x256xf32> to vector<16x256xf32>
    %35 = vector.broadcast %cst_11 : f32 to vector<16x256xf32>
    %36 = arith.select %32, %34, %35 : vector<16x256xi1>, vector<16x256xf32>
    %37 = vector.broadcast %24 : vector<1x256xi32> to vector<16x256xi32>
    %38 = arith.cmpi eq, %30, %37 : vector<16x256xi32>
    %cst_12 = arith.constant 0.000000e+00 : f32
    %39 = vector.shape_cast %14 : vector<1x256xf32> to vector<1x256xf32>
    %40 = vector.broadcast %39 : vector<1x256xf32> to vector<16x256xf32>
    %41 = vector.broadcast %cst_12 : f32 to vector<16x256xf32>
    %42 = arith.select %38, %40, %41 : vector<16x256xi1>, vector<16x256xf32>
    %43 = arith.addf %36, %42 : vector<16x256xf32>
    %c0_13 = arith.constant 0 : index
    %c0_14 = arith.constant 0 : index
    %c0_15 = arith.constant 0 : index
    %44 = vector.load %arg3[%c0_13, %c0_14, %c0_15] : memref<1x128x16xf32, #tpu.memory_space<vmem>>, vector<1x128x16xf32>
    %45 = vector.shape_cast %44 : vector<1x128x16xf32> to vector<128x16xf32>
    %cst_16 = arith.constant dense<0.000000e+00> : vector<128x256xf32>
    %46 = tpu.matmul %45, %43, %cst_16 {dimension_numbers = #tpu.dot_dimension_numbers<[1], [0], [0], [1], [0, 0, 1, 1], [], []>} : vector<128x16xf32>, vector<16x256xf32>, vector<128x256xf32> -> vector<128x256xf32>
    %47 = vector.shape_cast %46 : vector<128x256xf32> to vector<16x8x256xf32>
    %48 = tpu.iota {dimensions = array<i32: 0>} : vector<16x256xi32>
    %c0_i32 = arith.constant 0 : i32
    %49 = vector.broadcast %c0_i32 : i32 to vector<16x256xi32>
    %50 = arith.addi %48, %49 : vector<16x256xi32>
    %51 = vector.broadcast %25 : vector<1x256xi32> to vector<16x256xi32>
    %52 = arith.cmpi eq, %50, %51 : vector<16x256xi32>
    %cst_17 = arith.constant 0.000000e+00 : f32
    %53 = vector.shape_cast %19 : vector<1x256xf32> to vector<1x256xf32>
    %54 = vector.broadcast %53 : vector<1x256xf32> to vector<16x256xf32>
    %55 = vector.broadcast %cst_17 : f32 to vector<16x256xf32>
    %56 = arith.select %52, %54, %55 : vector<16x256xi1>, vector<16x256xf32>
    %57 = vector.broadcast %29 : vector<1x256xi32> to vector<16x256xi32>
    %58 = arith.cmpi eq, %50, %57 : vector<16x256xi32>
    %cst_18 = arith.constant 0.000000e+00 : f32
    %59 = vector.shape_cast %17 : vector<1x256xf32> to vector<1x256xf32>
    %60 = vector.broadcast %59 : vector<1x256xf32> to vector<16x256xf32>
    %61 = vector.broadcast %cst_18 : f32 to vector<16x256xf32>
    %62 = arith.select %58, %60, %61 : vector<16x256xi1>, vector<16x256xf32>
    %63 = arith.addf %56, %62 : vector<16x256xf32>
    %64 = vector.shape_cast %63 : vector<16x256xf32> to vector<16x1x256xf32>
    %65 = vector.broadcast %64 : vector<16x1x256xf32> to vector<16x8x256xf32>
    %66 = arith.mulf %47, %65 : vector<16x8x256xf32>
    %cst_19 = arith.constant dense<0.000000e+00> : vector<8x256xf32>
    %67 = vector.multi_reduction <add>, %66, %cst_19 [0] : vector<16x8x256xf32> to vector<8x256xf32>
    %c0_20 = arith.constant 0 : index
    %c0_21 = arith.constant 0 : index
    %c0_22 = arith.constant 0 : index
    %68 = vector.load %arg4[%c0_20, %c0_21, %c0_22] : memref<1x8x256xf32, #tpu.memory_space<vmem>>, vector<1x8x256xf32>
    %69 = vector.shape_cast %68 : vector<1x8x256xf32> to vector<8x256xf32>
    %70 = vector.shape_cast %67 : vector<8x256xf32> to vector<1x8x256xf32>
    tpu.vector_store %arg4[%c0_20, %c0_21, %c0_22], %70 {strides = array<i32>} : memref<1x8x256xf32, #tpu.memory_space<vmem>>, vector<1x8x256xf32>,
    return
  }
  func.func @transform_0(%arg0: i32, %arg1: i32) -> (i32, i32, i32) {
    %c0_i32 = arith.constant 0 : i32
    %c0_i32_0 = arith.constant 0 : i32
    return %arg0, %c0_i32, %arg1 : i32, i32, i32
  }
  func.func @transform_1(%arg0: i32, %arg1: i32) -> (i32, i32, i32) {
    %c0_i32 = arith.constant 0 : i32
    %c0_i32_0 = arith.constant 0 : i32
    %c0_i32_1 = arith.constant 0 : i32
    return %arg0, %c0_i32, %c0_i32_0 : i32, i32, i32
  }
  func.func @transform_2(%arg0: i32, %arg1: i32) -> (i32, i32, i32) {
    %c0_i32 = arith.constant 0 : i32
    %c0_i32_0 = arith.constant 0 : i32
    return %arg0, %c0_i32, %arg1 : i32, i32, i32
  }
}

</mosaic_0001>

<llo_original>
// kernel: tpu_custom_call.1
$region0: #{tpu_custom_call.1}
  #allocation0 [shape = 'u32[]', space=smem, size = 0x4, offset = 0x4, fixed_abs, tag = 'smem constant byte address 0x4 - core index']
  #allocation1 [shape = 'u32[144,128]{1,0:T(1,128)}', space=vmem, size = 0x12000, scoped, tag = 'internal scratch']
  %s0 = inlined_call_operand.vmem [shape: f32[2,2,256], index: 0, kind: input, shape index: {}]
  %s1 = inlined_call_operand.vmem [shape: f32[2,128,16], index: 1, kind: input, shape index: {}]
  %s2 = inlined_call_operand.hbm [shape: f32[2,8,256], index: 2, kind: output, shape index: {}]
  %s3 = sld [smem:[#allocation0]]
  $region41: #{tpu_custom_call.1} parent=0
    _
  %s5 = ssub.s32 1, %s3
  %s6 = scalar_select 0, %s5, %s3
  $region1: #{tpu_custom_call.1} parent=0
    #allocation2 [shape = 'u8[16384]{0}', space=vmem, size = 0x4000, scoped, tag = 'output window, operand 0']
    #allocation3 [shape = 's32[2]{0}', space=sflag, size = 0x8, scoped, tag = 'scoped memory for tpu_custom_call.1']
    %7 = vsyncpa [#allocation3], 0
    %s8 = scalar_lea.sflag [#allocation3], 1
    %9 = vsyncpa %s8, 0
    loop: start=0, step=1, limit=4
    $region2: #{tpu_custom_call.1} parent=1 // loop_pre_header
      _
    $region3: #{tpu_custom_call.1} parent=1 // loop_header
      %s11 = sphi 0, %s15
      %p12 = scmp.ge.s32.totalorder %s11, 4
      %s18 = sphi 0, %s30
      %s19 = sphi 0, %s26
      %s20 = sphi 0, %s18
      %s21 = sphi 0, %s19
      %s22 = sphi 0, %s20
      %s23 = sphi 0, %s21
      %s35 = sphi 0, %s37
      %s38 = sphi 0, %s35
      %s39 = sphi 0, %s38
      %s55 = sphi 0, %s39
      %s61 = sphi 0, %s63
      %s64 = sphi 0, %s61
      %s65 = sphi 0, %s64
      %s81 = sphi 0, %s65
      %s89 = sphi 0, %s91
      %s92 = sphi 0, %s89
      %s93 = sphi 0, %s92
      %s109 = sphi 0, %s93
    $region4: #{tpu_custom_call.1} parent=1 // loop_header_branch
      %14 = sbr.rel (%p12) target = $region8
    $region5: #{tpu_custom_call.1} parent=1 // loop_body
      %s16 = ssub.s32 %s11, 1
      %s17 = ssub.s32 %s11, 2
      %s24 = sadd.s32 1, %s19
      %p25 = scmp.ge.s32.totalorder %s24, 1
      %s26 = scalar_select %p25, 0, %s24
      %s27 = sadd.s32 1, %s18
      %s28 = scalar_select %p25, %s27, %s18
      %p29 = scmp.ge.s32.totalorder %s28, 2
      %s30 = scalar_select %p29, 0, %s28
      %s31 = ssub.s32 %s18, %s30
      %s32 = ssub.s32 %s19, %s26
      %s33 = sor.u32 %s31, %s32
      %p34 = scmp.eq.s32.totalorder %s33, 0
      %s36 = sadd.s32 %s35, 1
      %s37 = scalar_select %p34, %s35, %s36
      %p40 = pneg %p34
      %p41 = scmp.eq.s32.totalorder %s11, 1
      %p42 = por %p40, %p41
      %p43 = scmp.ne.s32.totalorder %s35, %s38
      %p44 = scmp.eq.s32.totalorder %s11, 0
      %p45 = por %p43, %p44
      %p46 = scmp.ne.s32.totalorder %s35, %s38
      %p47 = scmp.eq.s32.totalorder %s16, 1
      %p48 = por %p46, %p47
      %p49 = scmp.ne.s32.totalorder %s38, %s39
      %p50 = scmp.eq.s32.totalorder %s16, 0
      %p51 = por %p49, %p50
      %p52 = scmp.ne.s32.totalorder %s38, %s39
      %p53 = scmp.eq.s32.totalorder %s17, 1
      %p54 = por %p52, %p53
      %p56 = scmp.ne.s32.totalorder %s39, %s55
      %p57 = scmp.eq.s32.totalorder %s17, 0
      %p58 = por %p56, %p57
      %s59 = ssub.s32 %s18, %s30
      %p60 = scmp.eq.s32.totalorder %s59, 0
      %s62 = sadd.s32 %s61, 1
      %s63 = scalar_select %p60, %s61, %s62
      %p66 = pneg %p60
      %p67 = scmp.eq.s32.totalorder %s11, 1
      %p68 = por %p66, %p67
      %p69 = scmp.ne.s32.totalorder %s61, %s64
      %p70 = scmp.eq.s32.totalorder %s11, 0
      %p71 = por %p69, %p70
      %p72 = scmp.ne.s32.totalorder %s61, %s64
      %p73 = scmp.eq.s32.totalorder %s16, 1
      %p74 = por %p72, %p73
      %p75 = scmp.ne.s32.totalorder %s64, %s65
      %p76 = scmp.eq.s32.totalorder %s16, 0
      %p77 = por %p75, %p76
      %p78 = scmp.ne.s32.totalorder %s64, %s65
      %p79 = scmp.eq.s32.totalorder %s17, 1
      %p80 = por %p78, %p79
      %p82 = scmp.ne.s32.totalorder %s65, %s81
      %p83 = scmp.eq.s32.totalorder %s17, 0
      %p84 = por %p82, %p83
      %s85 = ssub.s32 %s18, %s30
      %s86 = ssub.s32 %s19, %s26
      %s87 = sor.u32 %s85, %s86
      %p88 = scmp.eq.s32.totalorder %s87, 0
      %s90 = sadd.s32 %s89, 1
      %s91 = scalar_select %p88, %s89, %s90
      %p94 = pneg %p88
      %p95 = scmp.eq.s32.totalorder %s11, 1
      %p96 = por %p94, %p95
      %p97 = scmp.ne.s32.totalorder %s89, %s92
      %p98 = scmp.eq.s32.totalorder %s11, 0
      %p99 = por %p97, %p98
      %p100 = scmp.ne.s32.totalorder %s89, %s92
      %p101 = scmp.eq.s32.totalorder %s16, 1
      %p102 = por %p100, %p101
      %p103 = scmp.ne.s32.totalorder %s92, %s93
      %p104 = scmp.eq.s32.totalorder %s16, 0
      %p105 = por %p103, %p104
      %p106 = scmp.ne.s32.totalorder %s92, %s93
      %p107 = scmp.eq.s32.totalorder %s17, 1
      %p108 = por %p106, %p107
      %p110 = scmp.ne.s32.totalorder %s93, %s109
      %p111 = scmp.eq.s32.totalorder %s17, 0
      %p112 = por %p110, %p111
      %p113 = scmp.le.s32.totalorder 1, %s11
      %p114 = scmp.lt.s32.totalorder %s11, 3
      %p115 = pnand %p113, %p114
      %p116 = pneg %p115
      // Predicated region
      $region9: #{tpu_custom_call.1} parent=5 // pred_check
        _
      $region10: #{tpu_custom_call.1} parent=5 // pred_check_branch
        %118 = sbr.rel (%p115) target = $region12
      $region11: #{tpu_custom_call.1} parent=5 // pred_region
        %s119 = ssub.s32 %s11, 1
      $region12: #{tpu_custom_call.1} parent=5 // pred_fallthru
        _
      %p120 = scmp.lt.s32.totalorder %s11, 2
      // Predicated region
      $region13: #{tpu_custom_call.1} parent=5 // pred_check
        %p121 = pneg %p120
      $region14: #{tpu_custom_call.1} parent=5 // pred_check_branch
        %123 = sbr.rel (%p121) target = $region16
      $region15: #{tpu_custom_call.1} parent=5 // pred_region
        // Predicated region
        $region17: #{tpu_custom_call.1} parent=15 // pred_check
          %p124 = pneg %p45
        $region18: #{tpu_custom_call.1} parent=15 // pred_check_branch
          %126 = sbr.rel (%p124) target = $region20
        $region19: #{tpu_custom_call.1} parent=15 // pred_region
          %s127 = smul.u32 2, %s19
          %p128 = scmp.lt.s32.totalorder %s18, 1
          %s129 = scalar_select %p128, %s18, 1
          %p130 = scmp.lt.s32.totalorder %s127, 1
          %s131 = scalar_select %p130, %s127, 1
          %s132 = smul.addr %s129, 2
          %s133 = sadd.s32 %s131, %s132
          %s134 = smul.addr %s133, 2
          %s135 = scalar_lea.vmem %s0, %s134
          %s136 = smul.u32 2, %s19
        $region20: #{tpu_custom_call.1} parent=15 // pred_fallthru
          _
        // Predicated region
        $region21: #{tpu_custom_call.1} parent=15 // pred_check
          %p137 = pneg %p71
        $region22: #{tpu_custom_call.1} parent=15 // pred_check_branch
          %139 = sbr.rel (%p137) target = $region24
        $region23: #{tpu_custom_call.1} parent=15 // pred_region
          %p140 = scmp.lt.s32.totalorder %s18, 1
          %s141 = scalar_select %p140, %s18, 1
          %s142 = smul.addr %s141, 16
          %s143 = smul.addr %s142, 8
          %s144 = scalar_lea.vmem %s1, %s143
        $region24: #{tpu_custom_call.1} parent=15 // pred_fallthru
          _
      $region16: #{tpu_custom_call.1} parent=5 // pred_fallthru
        _
      %p145 = scmp.le.s32.totalorder 1, %s11
      %p146 = scmp.lt.s32.totalorder %s11, 3
      %p147 = pnand %p145, %p146
      %p148 = pneg %p147
      // Predicated region
      $region25: #{tpu_custom_call.1} parent=5 // pred_check
        _
      $region26: #{tpu_custom_call.1} parent=5 // pred_check_branch
        %150 = sbr.rel (%p147) target = $region28
      $region27: #{tpu_custom_call.1} parent=5 // pred_region
        %s151 = ssub.s32 %s11, 1
        %s152 = smul.u32 2, %s21
        %p153 = scmp.lt.s32.totalorder %s20, 1
        %s154 = scalar_select %p153, %s20, 1
        %p155 = scmp.lt.s32.totalorder %s152, 1
        %s156 = scalar_select %p155, %s152, 1
        %s157 = smul.addr %s154, 2
        %s158 = sadd.s32 %s156, %s157
        %s159 = smul.addr %s158, 2
        %s160 = scalar_lea.vmem %s0, %s159
        %p161 = pneg %p51
        %p162 = pneg %p48
        %p163 = scmp.lt.s32.totalorder %s20, 1
        %s164 = scalar_select %p163, %s20, 1
        %s165 = smul.addr %s164, 16
        %s166 = smul.addr %s165, 8
        %s167 = scalar_lea.vmem %s1, %s166
        %p168 = pneg %p77
        %p169 = pneg %p74
        %p170 = pneg %p105
        %p171 = pneg %p102
        %s172 = sand.u32 %s92, 1
        %s173 = scalar_lea.sflag [#allocation3], %s172
        %s174 = sand.u32 %s92, 1
        %s175 = smul.addr %s174, 16
        %s176 = scalar_lea.vmem [#allocation2], %s175
        %s177 = smul.u32 2, %s21
        %p178 = scmp.lt.s32.totalorder %s20, 1
        %s179 = scalar_select %p178, %s20, 1
        %p180 = scmp.lt.s32.totalorder %s177, 1
        %s181 = scalar_select %p180, %s177, 1
        %s182 = smul.addr %s179, 2
        %s183 = sadd.s32 %s181, %s182
        %s184 = smul.addr %s183, 2
        %s185 = scalar_lea.vmem %s0, %s184
        %s186 = smul.u32 2, %s21
        %p187 = scmp.lt.s32.totalorder %s20, 1
        %s188 = scalar_select %p187, %s20, 1
        %s189 = smul.addr %s188, 16
        %s190 = smul.addr %s189, 8
        %s191 = scalar_lea.vmem %s1, %s190
        %s192 = smul.u32 2, %s21
        %v193 = vld [vmem:[%s185] ss:$2 sm:$0x3]
        %v194 = vmax.f32 %v193, 0.0
        %v195 = vmin.f32 %v194, 15.0
        %s196 = scalar_lea.vmem %s185, 1
        %v197 = vld [vmem:[%s196] ss:$2 sm:$0x3]
        %v198 = vmax.f32 %v197, 0.0
        %v199 = vmin.f32 %v198, 15.0
        %v200 = vfloor.f32 %v195
        %v201 = vfloor.f32 %v199
        %v202 = vsub.f32 %v195, %v200
        %v203 = vsub.f32 1.0, %v202
        %v204 = vsub.f32 %v199, %v201
        %v205 = vsub.f32 1.0, %v204
        %v206 = vcvt.f32.s32.to.zero.pseudo %v200
        %v207 = vadd.s32 %v206, 1
        %vm208 = vcmp.lt.s32.totalorder %v207, 15
        %v209 = vsel %vm208, %v207, 15
        %v210 = vcvt.f32.s32.to.zero.pseudo %v201
        %v211 = vadd.s32 %v210, 1
        %vm212 = vcmp.lt.s32.totalorder %v211, 15
        %v213 = vsel %vm212, %v211, 15
        %v214 = vlaneseq
        %v215 = vshrl.u32 %v214, 7
        %v216 = vadd.s32 %v215, 8
        %v217 = vlaneseq
        %v218 = vshrl.u32 %v217, 7
        %v219 = vsub.s32 0, %v218
        %v220 = vrot.slane %v206, %v219
        %v221 = vlaneseq
        %v222 = vshrl.u32 %v221, 7
        %v223 = vsub.s32 1, %v222
        %v224 = vrot.slane %v206, %v223
        %vm225 = vcmp.eq.s32.totalorder %v215, %v220
        %vm226 = vcmp.eq.s32.totalorder %v215, %v224
        %vm227 = vcmp.eq.s32.totalorder %v216, %v220
        %vm228 = vcmp.eq.s32.totalorder %v216, %v224
        %v230 = vlaneseq
        %v231 = vshrl.u32 %v230, 7
        %v232 = vsub.s32 0, %v231
        %v233 = vrot.slane %v203, %v232
        %v234 = vlaneseq
        %v235 = vshrl.u32 %v234, 7
        %v236 = vsub.s32 1, %v235
        %v237 = vrot.slane %v203, %v236
        %v240 = vsel %vm225, %v233, 0.0
        %v241 = vsel %vm226, %v237, 0.0
        %v242 = vsel %vm227, %v233, 0.0
        %v243 = vsel %vm228, %v237, 0.0
        %v244 = vlaneseq
        %v245 = vshrl.u32 %v244, 7
        %v246 = vsub.s32 0, %v245
        %v247 = vrot.slane %v209, %v246
        %v248 = vlaneseq
        %v249 = vshrl.u32 %v248, 7
        %v250 = vsub.s32 1, %v249
        %v251 = vrot.slane %v209, %v250
        %vm252 = vcmp.eq.s32.totalorder %v215, %v247
        %vm253 = vcmp.eq.s32.totalorder %v215, %v251
        %vm254 = vcmp.eq.s32.totalorder %v216, %v247
        %vm255 = vcmp.eq.s32.totalorder %v216, %v251
        %v257 = vlaneseq
        %v258 = vshrl.u32 %v257, 7
        %v259 = vsub.s32 0, %v258
        %v260 = vrot.slane %v202, %v259
        %v261 = vlaneseq
        %v262 = vshrl.u32 %v261, 7
        %v263 = vsub.s32 1, %v262
        %v264 = vrot.slane %v202, %v263
        %v267 = vsel %vm252, %v260, 0.0
        %v268 = vsel %vm253, %v264, 0.0
        %v269 = vsel %vm254, %v260, 0.0
        %v270 = vsel %vm255, %v264, 0.0
        %v271 = vadd.f32 %v240, %v267
        %v272 = vadd.f32 %v241, %v268
        %v273 = vadd.f32 %v242, %v269
        %v274 = vadd.f32 %v243, %v270
        %v275 = vld [vmem:[%s191] sm:$0xff]
        %v276 = vld [vmem:[%s191 + $0x8] sm:$0xff]
        %v277 = vld [vmem:[%s191 + $0x10] sm:$0xff]
        %v278 = vld [vmem:[%s191 + $0x18] sm:$0xff]
        %v279 = vld [vmem:[%s191 + $0x20] sm:$0xff]
        %v280 = vld [vmem:[%s191 + $0x28] sm:$0xff]
        %v281 = vld [vmem:[%s191 + $0x30] sm:$0xff]
        %v282 = vld [vmem:[%s191 + $0x38] sm:$0xff]
        %v283 = vld [vmem:[%s191 + $0x40] sm:$0xff]
        %v284 = vld [vmem:[%s191 + $0x48] sm:$0xff]
        %v285 = vld [vmem:[%s191 + $0x50] sm:$0xff]
        %v286 = vld [vmem:[%s191 + $0x58] sm:$0xff]
        %v287 = vld [vmem:[%s191 + $0x60] sm:$0xff]
        %v288 = vld [vmem:[%s191 + $0x68] sm:$0xff]
        %v289 = vld [vmem:[%s191 + $0x70] sm:$0xff]
        %v290 = vld [vmem:[%s191 + $0x78] sm:$0xff]
        %vm291 = vcmask 130048
        %v293 = vsel %vm291, %v275, 0
        %v296 = vsel %vm291, %v276, 0
        %v299 = vsel %vm291, %v277, 0
        %v302 = vsel %vm291, %v278, 0
        %v305 = vsel %vm291, %v279, 0
        %v308 = vsel %vm291, %v280, 0
        %v311 = vsel %vm291, %v281, 0
        %v314 = vsel %vm291, %v282, 0
        %v317 = vsel %vm291, %v283, 0
        %v320 = vsel %vm291, %v284, 0
        %v323 = vsel %vm291, %v285, 0
        %v326 = vsel %vm291, %v286, 0
        %v329 = vsel %vm291, %v287, 0
        %v332 = vsel %vm291, %v288, 0
        %v335 = vsel %vm291, %v289, 0
        %v338 = vsel %vm291, %v290, 0
        %340 = vmatprep.subr.mxu0 0.0
        %341 = vmatpush1.msra.mxu0 0.0
        %342 = vmatprep.subr.mxu0 0.0
        %343 = vmatpush1.msra.mxu0 0.0
        %344 = vmatprep.subr.mxu0 0.0
        %345 = vmatpush1.msra.mxu0 0.0
        %346 = vmatprep.subr.mxu0 0.0
        %347 = vmatpush1.msra.mxu0 0.0
        %348 = vmatprep.subr.mxu0 0.0
        %349 = vmatpush1.msra.mxu0 0.0
        %350 = vmatprep.subr.mxu0 0.0
        %351 = vmatpush1.msra.mxu0 0.0
        %352 = vmatprep.subr.mxu0 0.0
        %353 = vmatpush1.msra.mxu0 0.0
        %354 = vmatprep.subr.mxu0 0.0
        %355 = vmatpush1.msra.mxu0 0.0
        %356 = vmatprep.subr.mxu0 0.0
        %357 = vmatpush1.msra.mxu0 0.0
        %358 = vmatprep.subr.mxu0 0.0
        %359 = vmatpush1.msra.mxu0 0.0
        %360 = vmatprep.subr.mxu0 0.0
        %361 = vmatpush1.msra.mxu0 0.0
        %362 = vmatprep.subr.mxu0 0.0
        %363 = vmatpush1.msra.mxu0 0.0
        %364 = vmatprep.subr.mxu0 0.0
        %365 = vmatpush1.msra.mxu0 0.0
        %366 = vmatprep.subr.mxu0 0.0
        %367 = vmatpush1.msra.mxu0 0.0
        %368 = vmatprep.subr.mxu0 %v274
        %369 = vmatpush1.msra.mxu0 %v273
        %370 = vmatprep.subr.mxu0 %v272
        %371 = vmatpush1.msra.mxu0 %v271
        %372 = vmatprep.subr.mxu0 0.0
        %373 = vmatpush2.msra.mxu0 0.0
        %374 = vmatprep.subr.mxu0 0.0
        %375 = vmatpush2.msra.mxu0 0.0
        %376 = vmatprep.subr.mxu0 0.0
        %377 = vmatpush2.msra.mxu0 0.0
        %378 = vmatprep.subr.mxu0 0.0
        %379 = vmatpush2.msra.mxu0 0.0
        %380 = vmatprep.subr.mxu0 0.0
        %381 = vmatpush2.msra.mxu0 0.0
        %382 = vmatprep.subr.mxu0 0.0
        %383 = vmatpush2.msra.mxu0 0.0
        %384 = vmatprep.subr.mxu0 0.0
        %385 = vmatpush2.msra.mxu0 0.0
        %386 = vmatprep.subr.mxu0 0.0
        %387 = vmatpush2.msra.mxu0 0.0
        %388 = vmatprep.subr.mxu0 0.0
        %389 = vmatpush2.msra.mxu0 0.0
        %390 = vmatprep.subr.mxu0 0.0
        %391 = vmatpush2.msra.mxu0 0.0
        %392 = vmatprep.subr.mxu0 0.0
        %393 = vmatpush2.msra.mxu0 0.0
        %394 = vmatprep.subr.mxu0 0.0
        %395 = vmatpush2.msra.mxu0 0.0
        %396 = vmatprep.subr.mxu0 0.0
        %397 = vmatpush2.msra.mxu0 0.0
        %398 = vmatprep.subr.mxu0 0.0
        %399 = vmatpush2.msra.mxu0 0.0
        %400 = vmatprep.subr.mxu0 0.0
        %401 = vmatpush2.msra.mxu0 0.0
        %402 = vmatprep.subr.mxu0 0.0
        %403 = vmatpush2.msra.mxu0 0.0
        %404 = vmatprep.mubr.f32.mxu0 0.0
        %405 = vmatmul.mubr.f32.gmra.mxu0 %v293
        %v406 = vpop.f32.mrf.mxu0
        %v407 = vadd.f32 0.0, %v406
        %v408 = vpop.f32.mrf.mxu0
        %v409 = vadd.f32 0.0, %v408
        %410 = vmatprep.mubr.f32.mxu0 0.0
        %411 = vmatmul.mubr.f32.gmra.mxu0 %v296
        %v412 = vpop.f32.mrf.mxu0
        %v413 = vadd.f32 0.0, %v412
        %v414 = vpop.f32.mrf.mxu0
        %v415 = vadd.f32 0.0, %v414
        %416 = vmatprep.mubr.f32.mxu0 0.0
        %417 = vmatmul.mubr.f32.gmra.mxu0 %v299
        %v418 = vpop.f32.mrf.mxu0
        %v419 = vadd.f32 0.0, %v418
        %v420 = vpop.f32.mrf.mxu0
        %v421 = vadd.f32 0.0, %v420
        %422 = vmatprep.mubr.f32.mxu0 0.0
        %423 = vmatmul.mubr.f32.gmra.mxu0 %v302
        %v424 = vpop.f32.mrf.mxu0
        %v425 = vadd.f32 0.0, %v424
        %v426 = vpop.f32.mrf.mxu0
        %v427 = vadd.f32 0.0, %v426
        %428 = vmatprep.mubr.f32.mxu0 0.0
        %429 = vmatmul.mubr.f32.gmra.mxu0 %v305
        %v430 = vpop.f32.mrf.mxu0
        %v431 = vadd.f32 0.0, %v430
        %v432 = vpop.f32.mrf.mxu0
        %v433 = vadd.f32 0.0, %v432
        %434 = vmatprep.mubr.f32.mxu0 0.0
        %435 = vmatmul.mubr.f32.gmra.mxu0 %v308
        %v436 = vpop.f32.mrf.mxu0
        %v437 = vadd.f32 0.0, %v436
        %v438 = vpop.f32.mrf.mxu0
        %v439 = vadd.f32 0.0, %v438
        %440 = vmatprep.mubr.f32.mxu0 0.0
        %441 = vmatmul.mubr.f32.gmra.mxu0 %v311
        %v442 = vpop.f32.mrf.mxu0
        %v443 = vadd.f32 0.0, %v442
        %v444 = vpop.f32.mrf.mxu0
        %v445 = vadd.f32 0.0, %v444
        %446 = vmatprep.mubr.f32.mxu0 0.0
        %447 = vmatmul.mubr.f32.gmra.mxu0 %v314
        %v448 = vpop.f32.mrf.mxu0
        %v449 = vadd.f32 0.0, %v448
        %v450 = vpop.f32.mrf.mxu0
        %v451 = vadd.f32 0.0, %v450
        %452 = vmatprep.mubr.f32.mxu0 0.0
        %453 = vmatmul.mubr.f32.gmra.mxu0 %v317
        %v454 = vpop.f32.mrf.mxu0
        %v455 = vadd.f32 0.0, %v454
        %v456 = vpop.f32.mrf.mxu0
        %v457 = vadd.f32 0.0, %v456
        %458 = vmatprep.mubr.f32.mxu0 0.0
        %459 = vmatmul.mubr.f32.gmra.mxu0 %v320
        %v460 = vpop.f32.mrf.mxu0
        %v461 = vadd.f32 0.0, %v460
        %v462 = vpop.f32.mrf.mxu0
        %v463 = vadd.f32 0.0, %v462
        %464 = vmatprep.mubr.f32.mxu0 0.0
        %465 = vmatmul.mubr.f32.gmra.mxu0 %v323
        %v466 = vpop.f32.mrf.mxu0
        %v467 = vadd.f32 0.0, %v466
        %v468 = vpop.f32.mrf.mxu0
        %v469 = vadd.f32 0.0, %v468
        %470 = vmatprep.mubr.f32.mxu0 0.0
        %471 = vmatmul.mubr.f32.gmra.mxu0 %v326
        %v472 = vpop.f32.mrf.mxu0
        %v473 = vadd.f32 0.0, %v472
        %v474 = vpop.f32.mrf.mxu0
        %v475 = vadd.f32 0.0, %v474
        %476 = vmatprep.mubr.f32.mxu0 0.0
        %477 = vmatmul.mubr.f32.gmra.mxu0 %v329
        %v478 = vpop.f32.mrf.mxu0
        %v479 = vadd.f32 0.0, %v478
        %v480 = vpop.f32.mrf.mxu0
        %v481 = vadd.f32 0.0, %v480
        %482 = vmatprep.mubr.f32.mxu0 0.0
        %483 = vmatmul.mubr.f32.gmra.mxu0 %v332
        %v484 = vpop.f32.mrf.mxu0
        %v485 = vadd.f32 0.0, %v484
        %v486 = vpop.f32.mrf.mxu0
        %v487 = vadd.f32 0.0, %v486
        %488 = vmatprep.mubr.f32.mxu0 0.0
        %489 = vmatmul.mubr.f32.gmra.mxu0 %v335
        %v490 = vpop.f32.mrf.mxu0
        %v491 = vadd.f32 0.0, %v490
        %v492 = vpop.f32.mrf.mxu0
        %v493 = vadd.f32 0.0, %v492
        %494 = vmatprep.mubr.f32.mxu0 0.0
        %495 = vmatmul.mubr.f32.gmra.mxu0 %v338
        %v496 = vpop.f32.mrf.mxu0
        %v497 = vadd.f32 0.0, %v496
        %v498 = vpop.f32.mrf.mxu0
        %v499 = vadd.f32 0.0, %v498
        %500 = vdwg.mxu0
        %v501 = vlaneseq
        %v502 = vshrl.u32 %v501, 7
        %v503 = vsub.s32 0, %v502
        %v504 = vrot.slane %v210, %v503
        %v505 = vlaneseq
        %v506 = vshrl.u32 %v505, 7
        %v507 = vsub.s32 1, %v506
        %v508 = vrot.slane %v210, %v507
        %vm509 = vcmp.eq.s32.totalorder %v215, %v504
        %vm510 = vcmp.eq.s32.totalorder %v215, %v508
        %vm511 = vcmp.eq.s32.totalorder %v216, %v504
        %vm512 = vcmp.eq.s32.totalorder %v216, %v508
        %v514 = vlaneseq
        %v515 = vshrl.u32 %v514, 7
        %v516 = vsub.s32 0, %v515
        %v517 = vrot.slane %v205, %v516
        %v518 = vlaneseq
        %v519 = vshrl.u32 %v518, 7
        %v520 = vsub.s32 1, %v519
        %v521 = vrot.slane %v205, %v520
        %v524 = vsel %vm509, %v517, 0.0
        %v525 = vsel %vm510, %v521, 0.0
        %v526 = vsel %vm511, %v517, 0.0
        %v527 = vsel %vm512, %v521, 0.0
        %v528 = vlaneseq
        %v529 = vshrl.u32 %v528, 7
        %v530 = vsub.s32 0, %v529
        %v531 = vrot.slane %v213, %v530
        %v532 = vlaneseq
        %v533 = vshrl.u32 %v532, 7
        %v534 = vsub.s32 1, %v533
        %v535 = vrot.slane %v213, %v534
        %vm536 = vcmp.eq.s32.totalorder %v215, %v531
        %vm537 = vcmp.eq.s32.totalorder %v215, %v535
        %vm538 = vcmp.eq.s32.totalorder %v216, %v531
        %vm539 = vcmp.eq.s32.totalorder %v216, %v535
        %v541 = vlaneseq
        %v542 = vshrl.u32 %v541, 7
        %v543 = vsub.s32 0, %v542
        %v544 = vrot.slane %v204, %v543
        %v545 = vlaneseq
        %v546 = vshrl.u32 %v545, 7
        %v547 = vsub.s32 1, %v546
        %v548 = vrot.slane %v204, %v547
        %v551 = vsel %vm536, %v544, 0.0
        %v552 = vsel %vm537, %v548, 0.0
        %v553 = vsel %vm538, %v544, 0.0
        %v554 = vsel %vm539, %v548, 0.0
        %v555 = vadd.f32 %v524, %v551
        %v556 = vadd.f32 %v525, %v552
        %v557 = vadd.f32 %v526, %v553
        %v558 = vadd.f32 %v527, %v554
        %v563 = vcombine.low %v555, %v556
        %v564 = vcombine.high %v555, %v556
        %v566 = vunpack.c.l.s4 1966171168
        %v567 = vunpack.c.0.s8 %v566
        %v568 = vlaneseq
        %v569 = vshrl.u32 %v568, 7
        %v570 = vsub.s32 %v567, %v569
        %v571 = vrot.slane %v563, %v570
        %v573 = vunpack.c.l.s4 1966171168
        %v574 = vunpack.c.0.s8 %v573
        %v575 = vlaneseq
        %v576 = vshrl.u32 %v575, 7
        %v577 = vsub.s32 %v574, %v576
        %v578 = vrot.slane %v564, %v577
        %v579 = vcombine.high %v571, %v571
        %v580 = vcombine.high %v578, %v578
        %v582 = vunpack.c.l.s4 1966171168
        %v583 = vunpack.c.0.s8 %v582
        %v584 = vlaneseq
        %v585 = vshrl.u32 %v584, 7
        %v586 = vsub.s32 %v583, %v585
        %v587 = vrot.slane %v571, %v586
        %v589 = vunpack.c.l.s4 1966171168
        %v590 = vunpack.c.0.s8 %v589
        %v591 = vlaneseq
        %v592 = vshrl.u32 %v591, 7
        %v593 = vsub.s32 %v590, %v592
        %v594 = vrot.slane %v578, %v593
        %v596 = vunpack.c.l.s4 1966171168
        %v597 = vunpack.c.0.s8 %v596
        %v598 = vlaneseq
        %v599 = vshrl.u32 %v598, 7
        %v600 = vsub.s32 %v597, %v599
        %v601 = vrot.slane %v579, %v600
        %v603 = vunpack.c.l.s4 1966171168
        %v604 = vunpack.c.0.s8 %v603
        %v605 = vlaneseq
        %v606 = vshrl.u32 %v605, 7
        %v607 = vsub.s32 %v604, %v606
        %v608 = vrot.slane %v580, %v607
        %v609 = vcombine.high %v587, %v587
        %v610 = vcombine.high %v594, %v594
        %v611 = vcombine.high %v601, %v601
        %v612 = vcombine.high %v608, %v608
        %v613 = vcombine.low %v557, %v558
        %v614 = vcombine.high %v557, %v558
        %v616 = vunpack.c.l.s4 1966171168
        %v617 = vunpack.c.0.s8 %v616
        %v618 = vlaneseq
        %v619 = vshrl.u32 %v618, 7
        %v620 = vsub.s32 %v617, %v619
        %v621 = vrot.slane %v613, %v620
        %v623 = vunpack.c.l.s4 1966171168
        %v624 = vunpack.c.0.s8 %v623
        %v625 = vlaneseq
        %v626 = vshrl.u32 %v625, 7
        %v627 = vsub.s32 %v624, %v626
        %v628 = vrot.slane %v614, %v627
        %v629 = vcombine.high %v621, %v621
        %v630 = vcombine.high %v628, %v628
        %v632 = vunpack.c.l.s4 1966171168
        %v633 = vunpack.c.0.s8 %v632
        %v634 = vlaneseq
        %v635 = vshrl.u32 %v634, 7
        %v636 = vsub.s32 %v633, %v635
        %v637 = vrot.slane %v621, %v636
        %v639 = vunpack.c.l.s4 1966171168
        %v640 = vunpack.c.0.s8 %v639
        %v641 = vlaneseq
        %v642 = vshrl.u32 %v641, 7
        %v643 = vsub.s32 %v640, %v642
        %v644 = vrot.slane %v628, %v643
        %v646 = vunpack.c.l.s4 1966171168
        %v647 = vunpack.c.0.s8 %v646
        %v648 = vlaneseq
        %v649 = vshrl.u32 %v648, 7
        %v650 = vsub.s32 %v647, %v649
        %v651 = vrot.slane %v629, %v650
        %v653 = vunpack.c.l.s4 1966171168
        %v654 = vunpack.c.0.s8 %v653
        %v655 = vlaneseq
        %v656 = vshrl.u32 %v655, 7
        %v657 = vsub.s32 %v654, %v656
        %v658 = vrot.slane %v630, %v657
        %v659 = vcombine.high %v637, %v637
        %v660 = vcombine.high %v644, %v644
        %v661 = vcombine.high %v651, %v651
        %v662 = vcombine.high %v658, %v658
        %v663 = vlaneseq
        %v664 = vshrl.u32 %v663, 7
        %v665 = vsub.s32 0, %v664
        %v666 = vrot.slane %v587, %v665
        %v667 = vlaneseq
        %v668 = vshrl.u32 %v667, 7
        %v669 = vsub.s32 1, %v668
        %v670 = vrot.slane %v587, %v669
        %v671 = vlaneseq
        %v672 = vshrl.u32 %v671, 7
        %v673 = vsub.s32 0, %v672
        %v674 = vrot.slane %v601, %v673
        %v675 = vlaneseq
        %v676 = vshrl.u32 %v675, 7
        %v677 = vsub.s32 1, %v676
        %v678 = vrot.slane %v601, %v677
        %v679 = vlaneseq
        %v680 = vshrl.u32 %v679, 7
        %v681 = vsub.s32 0, %v680
        %v682 = vrot.slane %v609, %v681
        %v683 = vlaneseq
        %v684 = vshrl.u32 %v683, 7
        %v685 = vsub.s32 1, %v684
        %v686 = vrot.slane %v609, %v685
        %v687 = vlaneseq
        %v688 = vshrl.u32 %v687, 7
        %v689 = vsub.s32 0, %v688
        %v690 = vrot.slane %v611, %v689
        %v691 = vlaneseq
        %v692 = vshrl.u32 %v691, 7
        %v693 = vsub.s32 1, %v692
        %v694 = vrot.slane %v611, %v693
        %v695 = vlaneseq
        %v696 = vshrl.u32 %v695, 7
        %v697 = vsub.s32 0, %v696
        %v698 = vrot.slane %v594, %v697
        %v699 = vlaneseq
        %v700 = vshrl.u32 %v699, 7
        %v701 = vsub.s32 1, %v700
        %v702 = vrot.slane %v594, %v701
        %v703 = vlaneseq
        %v704 = vshrl.u32 %v703, 7
        %v705 = vsub.s32 0, %v704
        %v706 = vrot.slane %v608, %v705
        %v707 = vlaneseq
        %v708 = vshrl.u32 %v707, 7
        %v709 = vsub.s32 1, %v708
        %v710 = vrot.slane %v608, %v709
        %v711 = vlaneseq
        %v712 = vshrl.u32 %v711, 7
        %v713 = vsub.s32 0, %v712
        %v714 = vrot.slane %v610, %v713
        %v715 = vlaneseq
        %v716 = vshrl.u32 %v715, 7
        %v717 = vsub.s32 1, %v716
        %v718 = vrot.slane %v610, %v717
        %v719 = vlaneseq
        %v720 = vshrl.u32 %v719, 7
        %v721 = vsub.s32 0, %v720
        %v722 = vrot.slane %v612, %v721
        %v723 = vlaneseq
        %v724 = vshrl.u32 %v723, 7
        %v725 = vsub.s32 1, %v724
        %v726 = vrot.slane %v612, %v725
        %v727 = vlaneseq
        %v728 = vshrl.u32 %v727, 7
        %v729 = vsub.s32 0, %v728
        %v730 = vrot.slane %v637, %v729
        %v731 = vlaneseq
        %v732 = vshrl.u32 %v731, 7
        %v733 = vsub.s32 1, %v732
        %v734 = vrot.slane %v637, %v733
        %v735 = vlaneseq
        %v736 = vshrl.u32 %v735, 7
        %v737 = vsub.s32 0, %v736
        %v738 = vrot.slane %v651, %v737
        %v739 = vlaneseq
        %v740 = vshrl.u32 %v739, 7
        %v741 = vsub.s32 1, %v740
        %v742 = vrot.slane %v651, %v741
        %v743 = vlaneseq
        %v744 = vshrl.u32 %v743, 7
        %v745 = vsub.s32 0, %v744
        %v746 = vrot.slane %v659, %v745
        %v747 = vlaneseq
        %v748 = vshrl.u32 %v747, 7
        %v749 = vsub.s32 1, %v748
        %v750 = vrot.slane %v659, %v749
        %v751 = vlaneseq
        %v752 = vshrl.u32 %v751, 7
        %v753 = vsub.s32 0, %v752
        %v754 = vrot.slane %v661, %v753
        %v755 = vlaneseq
        %v756 = vshrl.u32 %v755, 7
        %v757 = vsub.s32 1, %v756
        %v758 = vrot.slane %v661, %v757
        %v759 = vlaneseq
        %v760 = vshrl.u32 %v759, 7
        %v761 = vsub.s32 0, %v760
        %v762 = vrot.slane %v644, %v761
        %v763 = vlaneseq
        %v764 = vshrl.u32 %v763, 7
        %v765 = vsub.s32 1, %v764
        %v766 = vrot.slane %v644, %v765
        %v767 = vlaneseq
        %v768 = vshrl.u32 %v767, 7
        %v769 = vsub.s32 0, %v768
        %v770 = vrot.slane %v658, %v769
        %v771 = vlaneseq
        %v772 = vshrl.u32 %v771, 7
        %v773 = vsub.s32 1, %v772
        %v774 = vrot.slane %v658, %v773
        %v775 = vlaneseq
        %v776 = vshrl.u32 %v775, 7
        %v777 = vsub.s32 0, %v776
        %v778 = vrot.slane %v660, %v777
        %v779 = vlaneseq
        %v780 = vshrl.u32 %v779, 7
        %v781 = vsub.s32 1, %v780
        %v782 = vrot.slane %v660, %v781
        %v783 = vlaneseq
        %v784 = vshrl.u32 %v783, 7
        %v785 = vsub.s32 0, %v784
        %v786 = vrot.slane %v662, %v785
        %v787 = vlaneseq
        %v788 = vshrl.u32 %v787, 7
        %v789 = vsub.s32 1, %v788
        %v790 = vrot.slane %v662, %v789
        %v823 = vmul.f32 %v407, %v666
        %v824 = vmul.f32 %v409, %v670
        %v825 = vmul.f32 %v413, %v674
        %v826 = vmul.f32 %v415, %v678
        %v827 = vmul.f32 %v419, %v682
        %v828 = vmul.f32 %v421, %v686
        %v829 = vmul.f32 %v425, %v690
        %v830 = vmul.f32 %v427, %v694
        %v831 = vmul.f32 %v431, %v698
        %v832 = vmul.f32 %v433, %v702
        %v833 = vmul.f32 %v437, %v706
        %v834 = vmul.f32 %v439, %v710
        %v835 = vmul.f32 %v443, %v714
        %v836 = vmul.f32 %v445, %v718
        %v837 = vmul.f32 %v449, %v722
        %v838 = vmul.f32 %v451, %v726
        %v839 = vmul.f32 %v455, %v730
        %v840 = vmul.f32 %v457, %v734
        %v841 = vmul.f32 %v461, %v738
        %v842 = vmul.f32 %v463, %v742
        %v843 = vmul.f32 %v467, %v746
        %v844 = vmul.f32 %v469, %v750
        %v845 = vmul.f32 %v473, %v754
        %v846 = vmul.f32 %v475, %v758
        %v847 = vmul.f32 %v479, %v762
        %v848 = vmul.f32 %v481, %v766
        %v849 = vmul.f32 %v485, %v770
        %v850 = vmul.f32 %v487, %v774
        %v851 = vmul.f32 %v491, %v778
        %v852 = vmul.f32 %v493, %v782
        %v853 = vmul.f32 %v497, %v786
        %v854 = vmul.f32 %v499, %v790
        %v855 = vadd.f32 %v823, %v825
        %v856 = vadd.f32 %v855, %v827
        %v857 = vadd.f32 %v856, %v829
        %v858 = vadd.f32 %v857, %v831
        %v859 = vadd.f32 %v858, %v833
        %v860 = vadd.f32 %v859, %v835
        %v861 = vadd.f32 %v860, %v837
        %v862 = vadd.f32 %v861, %v839
        %v863 = vadd.f32 %v862, %v841
        %v864 = vadd.f32 %v863, %v843
        %v865 = vadd.f32 %v864, %v845
        %v866 = vadd.f32 %v865, %v847
        %v867 = vadd.f32 %v866, %v849
        %v868 = vadd.f32 %v867, %v851
        %v869 = vadd.f32 %v868, %v853
        %v870 = vadd.f32 %v824, %v826
        %v871 = vadd.f32 %v870, %v828
        %v872 = vadd.f32 %v871, %v830
        %v873 = vadd.f32 %v872, %v832
        %v874 = vadd.f32 %v873, %v834
        %v875 = vadd.f32 %v874, %v836
        %v876 = vadd.f32 %v875, %v838
        %v877 = vadd.f32 %v876, %v840
        %v878 = vadd.f32 %v877, %v842
        %v879 = vadd.f32 %v878, %v844
        %v880 = vadd.f32 %v879, %v846
        %v881 = vadd.f32 %v880, %v848
        %v882 = vadd.f32 %v881, %v850
        %v883 = vadd.f32 %v882, %v852
        %v884 = vadd.f32 %v883, %v854
        %885 = vst [vmem:[%s176] sm:$0xff] %v869
        %886 = vst [vmem:[%s176 + $0x8] sm:$0xff] %v884
        %s887 = sand.u32 %s92, 1
        %s888 = scalar_lea.sflag [#allocation3], %s887
        %s889 = sand.u32 %s92, 1
        %s890 = smul.addr %s889, 16
        %s891 = scalar_lea.vmem [#allocation2], %s890
        // Predicated region
        $region29: #{tpu_custom_call.1} parent=27 // pred_check
          %p892 = pneg %p102
        $region30: #{tpu_custom_call.1} parent=27 // pred_check_branch
          %894 = sbr.rel (%p892) target = $region32
        $region31: #{tpu_custom_call.1} parent=27 // pred_region
          %s895 = smul.u32 2, %s21
          %s897 = ssub.s32 256, 256
          %898 = vsyncadd %s888, %s897
          %s899 = smul.addr %s20, 2
          %s900 = sadd.s32 %s895, %s899
          %s901 = smul.addr %s900, 128
          %s902 = scalar_lea.hbm %s2, %s901
          %s904 = sshll.u32 %s891, 4
          %s905 = int_to_ptr.vmem [resolvable:$true] %s904
          %907 = dma.vmem_to_hbm [thread:$0]  %s905, 256, %s902, %s888
        $region32: #{tpu_custom_call.1} parent=27 // pred_fallthru
          _
      $region28: #{tpu_custom_call.1} parent=5 // pred_fallthru
        _
      %p908 = scmp.le.s32.totalorder 2, %s11
      // Predicated region
      $region33: #{tpu_custom_call.1} parent=5 // pred_check
        %p909 = pneg %p908
      $region34: #{tpu_custom_call.1} parent=5 // pred_check_branch
        %911 = sbr.rel (%p909) target = $region36
      $region35: #{tpu_custom_call.1} parent=5 // pred_region
        %s912 = ssub.s32 %s11, 2
        // Predicated region
        $region37: #{tpu_custom_call.1} parent=35 // pred_check
          %p913 = pneg %p108
        $region38: #{tpu_custom_call.1} parent=35 // pred_check_branch
          %915 = sbr.rel (%p913) target = $region40
        $region39: #{tpu_custom_call.1} parent=35 // pred_region
          %s916 = sand.u32 %s93, 1
          %s917 = scalar_lea.sflag [#allocation3], %s916
          %s918 = sand.u32 %s93, 1
          %s919 = smul.addr %s918, 16
          %s920 = scalar_lea.vmem [#allocation2], %s919
          %921 = dma.done %s917, 256
        $region40: #{tpu_custom_call.1} parent=35 // pred_fallthru
          _
      $region36: #{tpu_custom_call.1} parent=5 // pred_fallthru
        _
    $region6: #{tpu_custom_call.1} parent=1 // loop_footer
      %s15 = sadd.s32 1, %s11
    $region7: #{tpu_custom_call.1} parent=1 // loop_footer_branch
      %10 = sbr.rel target = $region3
    $region8: #{tpu_custom_call.1} parent=1 // loop_exit
      _
    %922 = vsyncpa [#allocation3], 1
    %s923 = scalar_lea.sflag [#allocation3], 1
    %924 = vsyncpa %s923, 1

</llo_original>
